<compile_context>
chip_gen: v7x
topology: tpu7x:2x2x1
jax: 0.10.0
libtpu: 0.0.40
codegen_flags: <defaults>
</compile_context>

<pallas_src>
import functools

import jax
import jax.numpy as jnp
from jax.experimental import pallas as pl
from jax.experimental.pallas import tpu as pltpu


# ----------------------------- fused kernel --------------------------------


def _emb2emb_fused_kernel(x_ref, y_ref, mw_ref, mb_ref,
                          w1_ref, b1_ref, w2_ref, b2_ref, w3t_ref, b3_ref,
                          o_ref, *, batch, adversarial_lambda):
    """Fused mapping + MSE + critic MLP + both cross-entropy losses.

    o_ref (SMEM, shape (4,)): [loss, task_loss, critic_loss, train_critic_loss]
    """
    x = x_ref[...]
    y = y_ref[...]

    # --- 1) mapping: out = x @ Wm + bm (intermediate never leaves VMEM/vregs) ---
    out = jnp.dot(x, mw_ref[...], preferred_element_type=jnp.float32) + mb_ref[...]

    # --- 2) task loss: MSE(out, y), mean over all elements -----------------------
    diff = out - y
    task_loss = jnp.mean(diff * diff)

    # --- 3) critic forward, once, on [Y ; out]  (2B, D) built on-chip ------------
    all_emb = jnp.concatenate([y, out], axis=0)
    h = jnp.maximum(
        jnp.dot(all_emb, w1_ref[...], preferred_element_type=jnp.float32) + b1_ref[...],
        0.0)
    h = jnp.maximum(
        jnp.dot(h, w2_ref[...], preferred_element_type=jnp.float32) + b2_ref[...],
        0.0)

    # Final Linear(H, 2) as two lane-reductions (avoid a 2-wide MXU output).
    l0 = jnp.sum(h * w3t_ref[0:1, :], axis=-1, keepdims=True) + b3_ref[0]   # (2B, 1)
    l1 = jnp.sum(h * w3t_ref[1:2, :], axis=-1, keepdims=True) + b3_ref[1]   # (2B, 1)

    # Numerically-stable 2-class cross entropy per row.
    m = jnp.maximum(l0, l1)
    lse = m + jnp.log(jnp.exp(l0 - m) + jnp.exp(l1 - m))                    # (2B, 1)

    n2 = 2 * batch
    row = jax.lax.broadcasted_iota(jnp.int32, (n2, 1), 0)
    is_real = row < batch                              # labels: [1]*B then [0]*B

    # train_critic_loss: mean CE over all 2B rows vs. their labels.
    ce_all = lse - jnp.where(is_real, l1, l0)
    train_critic_loss = jnp.sum(ce_all) * (1.0 / n2)

    # critic_loss: mean CE over the generated (bottom B) rows vs. label 0.
    critic_loss = jnp.sum(jnp.where(is_real, 0.0, lse - l0)) * (1.0 / batch)

    loss = task_loss - adversarial_lambda * critic_loss

    o_ref[0] = loss
    o_ref[1] = task_loss
    o_ref[2] = critic_loss
    o_ref[3] = train_critic_loss


# ----------------------------- wrapper --------------------------------------


def emb2emb_forward(x, y, map_w, map_b, critic_params, adversarial_lambda):
    """Single pallas_call producing (loss, task_loss, critic_loss, train_critic_loss)."""
    w1, b1, w2, b2, w3t, b3 = critic_params
    batch = x.shape[0]

    kernel = functools.partial(
        _emb2emb_fused_kernel,
        batch=batch,
        adversarial_lambda=float(adversarial_lambda),
    )

    vmem = pl.BlockSpec(memory_space=pltpu.MemorySpace.VMEM)
    smem = pl.BlockSpec(memory_space=pltpu.MemorySpace.SMEM)

    out = pl.pallas_call(
        kernel,
        out_shape=jax.ShapeDtypeStruct((4,), jnp.float32),
        in_specs=[vmem] * 9 + [smem],       # b3 (2,) lives in SMEM (scalar reads)
        out_specs=smem,                     # 1-D SMEM: no (8,128) padding
    )(x, y, map_w, map_b, w1, b1, w2, b2, w3t, b3)
    return out[0], out[1], out[2], out[3]


# ----------------------------- Emb2Emb --------------------------------------


class Emb2EmbPallas:
    """JAX/Pallas re-implementation of Emb2Emb's training forward (MODE_EMB2EMB,
    use_adversarial_term=True, real_data='input')."""

    def __init__(self, key, embedding_dim=32, critic_hidden_units=32,
                 critic_hidden_layers=1, adversarial_lambda=0.5):
        assert critic_hidden_layers == 1, "kernel hardcodes 1 hidden layer"
        d, h = embedding_dim, critic_hidden_units
        ks = jax.random.split(key, 8)
        s = 0.05
        # mapping: Linear(D, D), weights stored [in, out]
        self.map_w = jax.random.normal(ks[0], (d, d), jnp.float32) * s
        self.map_b = jax.random.normal(ks[1], (1, d), jnp.float32) * s
        # critic: Linear(D,H), ReLU, Linear(H,H), ReLU, Linear(H,2)
        # last layer stored transposed (2, H) lane-dense; its bias as (2,) for SMEM.
        self.critic_params = (
            jax.random.normal(ks[2], (d, h), jnp.float32) * s,
            jax.random.normal(ks[3], (1, h), jnp.float32) * s,
            jax.random.normal(ks[4], (h, h), jnp.float32) * s,
            jax.random.normal(ks[5], (1, h), jnp.float32) * s,
            jax.random.normal(ks[6], (2, h), jnp.float32) * s,   # W3^T
            jax.random.normal(ks[7], (2,), jnp.float32) * s,     # b3
        )
        self.adversarial_lambda = adversarial_lambda

    def forward(self, x_embeddings, y_embeddings):
        return emb2emb_forward(x_embeddings, y_embeddings, self.map_w, self.map_b,
                               self.critic_params, self.adversarial_lambda)


# ----------------------------- main ------------------------------------------

if __name__ == "__main__":
    B, D, H = 8, 32, 32
    key = jax.random.PRNGKey(0)
    k_model, k_x, k_y = jax.random.split(key, 3)

    model = Emb2EmbPallas(k_model, embedding_dim=D, critic_hidden_units=H,
                          critic_hidden_layers=1, adversarial_lambda=0.5)

    # Synthetic autoencoder bottleneck embeddings for input / target sentences.
    x_emb = jax.random.normal(k_x, (B, D), jnp.float32)
    y_emb = jax.random.normal(k_y, (B, D), jnp.float32)

    loss, task_loss, critic_loss, train_critic_loss = model.forward(x_emb, y_emb)
    jax.block_until_ready((loss, task_loss, critic_loss, train_critic_loss))

    assert all(bool(jnp.isfinite(v)) for v in
               (loss, task_loss, critic_loss, train_critic_loss))
    print("KERNEL_OK")
</pallas_src>

<mosaic_0001>
module attributes {stable_mosaic.version = 11 : i64} {
  func.func @_emb2emb_fused_kernel(%arg0: memref<8x32xf32, #tpu.memory_space<vmem>>, %arg1: memref<8x32xf32, #tpu.memory_space<vmem>>, %arg2: memref<32x32xf32, #tpu.memory_space<vmem>>, %arg3: memref<1x32xf32, #tpu.memory_space<vmem>>, %arg4: memref<32x32xf32, #tpu.memory_space<vmem>>, %arg5: memref<1x32xf32, #tpu.memory_space<vmem>>, %arg6: memref<32x32xf32, #tpu.memory_space<vmem>>, %arg7: memref<1x32xf32, #tpu.memory_space<vmem>>, %arg8: memref<2x32xf32, #tpu.memory_space<vmem>>, %arg9: memref<2xf32, #tpu.memory_space<smem>>, %arg10: memref<4xf32, #tpu.memory_space<smem>>) attributes {dimension_semantics = [], scalar_prefetch = 0 : i64, scratch_operands = 0 : i64, tpu.core_type = #tpu.core_type<tc>} {
    %c0 = arith.constant 0 : index
    %c0_0 = arith.constant 0 : index
    %0 = vector.load %arg0[%c0, %c0_0] : memref<8x32xf32, #tpu.memory_space<vmem>>, vector<8x32xf32>
    %c0_1 = arith.constant 0 : index
    %c0_2 = arith.constant 0 : index
    %1 = vector.load %arg1[%c0_1, %c0_2] : memref<8x32xf32, #tpu.memory_space<vmem>>, vector<8x32xf32>
    %c0_3 = arith.constant 0 : index
    %c0_4 = arith.constant 0 : index
    %2 = vector.load %arg2[%c0_3, %c0_4] : memref<32x32xf32, #tpu.memory_space<vmem>>, vector<32x32xf32>
    %cst = arith.constant dense<0.000000e+00> : vector<8x32xf32>
    %3 = tpu.matmul %0, %2, %cst {dimension_numbers = #tpu.dot_dimension_numbers<[1], [0], [0], [1], [0, 0, 1, 1], [], []>} : vector<8x32xf32>, vector<32x32xf32>, vector<8x32xf32> -> vector<8x32xf32>
    %c0_5 = arith.constant 0 : index
    %c0_6 = arith.constant 0 : index
    %4 = vector.load %arg3[%c0_5, %c0_6] : memref<1x32xf32, #tpu.memory_space<vmem>>, vector<1x32xf32>
    %5 = vector.broadcast %4 : vector<1x32xf32> to vector<8x32xf32>
    %6 = arith.addf %3, %5 : vector<8x32xf32>
    %7 = arith.subf %6, %1 : vector<8x32xf32>
    %8 = arith.mulf %7, %7 : vector<8x32xf32>
    %9 = vector.shape_cast %8 : vector<8x32xf32> to vector<1x8x32xf32>
    %cst_7 = arith.constant dense<0.000000e+00> : vector<1xf32>
    %10 = vector.multi_reduction <add>, %9, %cst_7 [1, 2] : vector<1x8x32xf32> to vector<1xf32>
    %11 = vector.shape_cast %10 : vector<1xf32> to vector<1x1x1xf32>
    %12 = vector.extract %11[0, 0, 0] : f32 from vector<1x1x1xf32>
    %cst_8 = arith.constant 2.560000e+02 : f32
    %13 = arith.divf %12, %cst_8 : f32
    %14 = tpu.concatenate %1, %6 in 0 : vector<8x32xf32>, vector<8x32xf32> -> vector<16x32xf32>
    %c0_9 = arith.constant 0 : index
    %c0_10 = arith.constant 0 : index
    %15 = vector.load %arg4[%c0_9, %c0_10] : memref<32x32xf32, #tpu.memory_space<vmem>>, vector<32x32xf32>
    %cst_11 = arith.constant dense<0.000000e+00> : vector<16x32xf32>
    %16 = tpu.matmul %14, %15, %cst_11 {dimension_numbers = #tpu.dot_dimension_numbers<[1], [0], [0], [1], [0, 0, 1, 1], [], []>} : vector<16x32xf32>, vector<32x32xf32>, vector<16x32xf32> -> vector<16x32xf32>
    %c0_12 = arith.constant 0 : index
    %c0_13 = arith.constant 0 : index
    %17 = vector.load %arg5[%c0_12, %c0_13] : memref<1x32xf32, #tpu.memory_space<vmem>>, vector<1x32xf32>
    %18 = vector.broadcast %17 : vector<1x32xf32> to vector<16x32xf32>
    %19 = arith.addf %16, %18 : vector<16x32xf32>
    %cst_14 = arith.constant 0.000000e+00 : f32
    %20 = vector.broadcast %cst_14 : f32 to vector<16x32xf32>
    %21 = arith.maximumf %19, %20 : vector<16x32xf32>
    %c0_15 = arith.constant 0 : index
    %c0_16 = arith.constant 0 : index
    %22 = vector.load %arg6[%c0_15, %c0_16] : memref<32x32xf32, #tpu.memory_space<vmem>>, vector<32x32xf32>
    %cst_17 = arith.constant dense<0.000000e+00> : vector<16x32xf32>
    %23 = tpu.matmul %21, %22, %cst_17 {dimension_numbers = #tpu.dot_dimension_numbers<[1], [0], [0], [1], [0, 0, 1, 1], [], []>} : vector<16x32xf32>, vector<32x32xf32>, vector<16x32xf32> -> vector<16x32xf32>
    %c0_18 = arith.constant 0 : index
    %c0_19 = arith.constant 0 : index
    %24 = vector.load %arg7[%c0_18, %c0_19] : memref<1x32xf32, #tpu.memory_space<vmem>>, vector<1x32xf32>
    %25 = vector.broadcast %24 : vector<1x32xf32> to vector<16x32xf32>
    %26 = arith.addf %23, %25 : vector<16x32xf32>
    %cst_20 = arith.constant 0.000000e+00 : f32
    %27 = vector.broadcast %cst_20 : f32 to vector<16x32xf32>
    %28 = arith.maximumf %26, %27 : vector<16x32xf32>
    %c0_21 = arith.constant 0 : index
    %c0_22 = arith.constant 0 : index
    %29 = vector.load %arg8[%c0_21, %c0_22] : memref<2x32xf32, #tpu.memory_space<vmem>>, vector<1x32xf32>
    %30 = vector.broadcast %29 : vector<1x32xf32> to vector<16x32xf32>
    %31 = arith.mulf %28, %30 : vector<16x32xf32>
    %cst_23 = arith.constant dense<0.000000e+00> : vector<16xf32>
    %32 = vector.multi_reduction <add>, %31, %cst_23 [1] : vector<16x32xf32> to vector<16xf32>
    %33 = vector.shape_cast %32 : vector<16xf32> to vector<16x1xf32>
    %c0_24 = arith.constant 0 : index
    %34 = memref.load %arg9[%c0_24] : memref<2xf32, #tpu.memory_space<smem>>
    %35 = vector.broadcast %34 : f32 to vector<16x1xf32>
    %36 = arith.addf %33, %35 : vector<16x1xf32>
    %c1 = arith.constant 1 : index
    %c0_25 = arith.constant 0 : index
    %37 = vector.load %arg8[%c1, %c0_25] : memref<2x32xf32, #tpu.memory_space<vmem>>, vector<1x32xf32>
    %38 = vector.broadcast %37 : vector<1x32xf32> to vector<16x32xf32>
    %39 = arith.mulf %28, %38 : vector<16x32xf32>
    %cst_26 = arith.constant dense<0.000000e+00> : vector<16xf32>
    %40 = vector.multi_reduction <add>, %39, %cst_26 [1] : vector<16x32xf32> to vector<16xf32>
    %41 = vector.shape_cast %40 : vector<16xf32> to vector<16x1xf32>
    %c1_27 = arith.constant 1 : index
    %42 = memref.load %arg9[%c1_27] : memref<2xf32, #tpu.memory_space<smem>>
    %43 = vector.broadcast %42 : f32 to vector<16x1xf32>
    %44 = arith.addf %41, %43 : vector<16x1xf32>
    %45 = arith.maximumf %36, %44 : vector<16x1xf32>
    %46 = arith.subf %36, %45 : vector<16x1xf32>
    %47 = math.exp %46 : vector<16x1xf32>
    %48 = arith.subf %44, %45 : vector<16x1xf32>
    %49 = math.exp %48 : vector<16x1xf32>
    %50 = arith.addf %47, %49 : vector<16x1xf32>
    %51 = math.log %50 : vector<16x1xf32>
    %52 = arith.addf %45, %51 : vector<16x1xf32>
    %53 = tpu.iota {dimensions = array<i32: 0>} : vector<16x1xi32>
    %c8_i32 = arith.constant 8 : i32
    %54 = vector.broadcast %c8_i32 : i32 to vector<16x1xi32>
    %55 = arith.cmpi slt, %53, %54 : vector<16x1xi32>
    %56 = arith.select %55, %44, %36 : vector<16x1xi1>, vector<16x1xf32>
    %57 = arith.subf %52, %56 : vector<16x1xf32>
    %58 = vector.shape_cast %57 : vector<16x1xf32> to vector<1x16x1xf32>
    %cst_28 = arith.constant dense<0.000000e+00> : vector<1xf32>
    %59 = vector.multi_reduction <add>, %58, %cst_28 [1, 2] : vector<1x16x1xf32> to vector<1xf32>
    %60 = vector.shape_cast %59 : vector<1xf32> to vector<1x1x1xf32>
    %61 = vector.extract %60[0, 0, 0] : f32 from vector<1x1x1xf32>
    %cst_29 = arith.constant 6.250000e-02 : f32
    %62 = arith.mulf %61, %cst_29 : f32
    %63 = arith.subf %52, %36 : vector<16x1xf32>
    %cst_30 = arith.constant 0.000000e+00 : f32
    %64 = vector.broadcast %cst_30 : f32 to vector<16x1xf32>
    %65 = arith.select %55, %64, %63 : vector<16x1xi1>, vector<16x1xf32>
    %66 = vector.shape_cast %65 : vector<16x1xf32> to vector<1x16x1xf32>
    %cst_31 = arith.constant dense<0.000000e+00> : vector<1xf32>
    %67 = vector.multi_reduction <add>, %66, %cst_31 [1, 2] : vector<1x16x1xf32> to vector<1xf32>
    %68 = vector.shape_cast %67 : vector<1xf32> to vector<1x1x1xf32>
    %69 = vector.extract %68[0, 0, 0] : f32 from vector<1x1x1xf32>
    %cst_32 = arith.constant 1.250000e-01 : f32
    %70 = arith.mulf %69, %cst_32 : f32
    %cst_33 = arith.constant 5.000000e-01 : f32
    %71 = arith.mulf %cst_33, %70 : f32
    %72 = arith.subf %13, %71 : f32
    %c0_34 = arith.constant 0 : index
    %73 = memref.load %arg10[%c0_34] : memref<4xf32, #tpu.memory_space<smem>>
    memref.store %72, %arg10[%c0_34] : memref<4xf32, #tpu.memory_space<smem>>
    %c1_35 = arith.constant 1 : index
    %74 = memref.load %arg10[%c1_35] : memref<4xf32, #tpu.memory_space<smem>>
    memref.store %13, %arg10[%c1_35] : memref<4xf32, #tpu.memory_space<smem>>
    %c2 = arith.constant 2 : index
    %75 = memref.load %arg10[%c2] : memref<4xf32, #tpu.memory_space<smem>>
    memref.store %70, %arg10[%c2] : memref<4xf32, #tpu.memory_space<smem>>
    %c3 = arith.constant 3 : index
    %76 = memref.load %arg10[%c3] : memref<4xf32, #tpu.memory_space<smem>>
    memref.store %62, %arg10[%c3] : memref<4xf32, #tpu.memory_space<smem>>
    return
  }
}

</mosaic_0001>

<llo_original>
// kernel: tpu_custom_call.1
$region0: #{tpu_custom_call.1}
  #allocation0 [shape = 'u32[]', space=smem, size = 0x4, offset = 0x4, fixed_abs, tag = 'smem constant byte address 0x4 - core index']
  #allocation1 [shape = 'u32[144,128]{1,0:T(1,128)}', space=vmem, size = 0x12000, scoped, tag = 'internal scratch']
  %s0 = inlined_call_operand.hbm [shape: f32[8,32], index: 0, kind: input, shape index: {}]
  %s1 = inlined_call_operand.hbm [shape: f32[8,32], index: 1, kind: input, shape index: {}]
  %s2 = inlined_call_operand.hbm [shape: f32[32,32], index: 2, kind: input, shape index: {}]
  %s3 = inlined_call_operand.vmem [shape: f32[1,32], index: 3, kind: input, shape index: {}]
  %s4 = inlined_call_operand.hbm [shape: f32[32,32], index: 4, kind: input, shape index: {}]
  %s5 = inlined_call_operand.vmem [shape: f32[1,32], index: 5, kind: input, shape index: {}]
  %s6 = inlined_call_operand.hbm [shape: f32[32,32], index: 6, kind: input, shape index: {}]
  %s7 = inlined_call_operand.vmem [shape: f32[1,32], index: 7, kind: input, shape index: {}]
  %s8 = inlined_call_operand.vmem [shape: f32[2,32], index: 8, kind: input, shape index: {}]
  %s9 = inlined_call_operand.vmem [shape: f32[2], index: 9, kind: input, shape index: {}]
  %s10 = inlined_call_operand.hbm [shape: f32[4], index: 10, kind: output, shape index: {}]
  %s11 = sld [smem:[#allocation0]]
  $region74: #{tpu_custom_call.1} parent=0
    _
  %s13 = ssub.s32 1, %s11
  %s14 = scalar_select 0, %s13, %s11
  $region1: #{tpu_custom_call.1} parent=0
    #allocation2 [shape = 'u8[4096]{0}', space=vmem, size = 0x1000, scoped, tag = 'input window, operand 0, single buffered']
    #allocation3 [shape = 's32[1]{0}', space=sflag, size = 0x4, scoped, tag = 'scoped memory for tpu_custom_call.1']
    #allocation4 [shape = 's32[1]{0}', space=sflag, size = 0x4, scoped, tag = 'scoped memory for tpu_custom_call.1']
    #allocation5 [shape = 's32[1]{0}', space=sflag, size = 0x4, scoped, tag = 'scoped memory for tpu_custom_call.1']
    #allocation6 [shape = 'u8[4096]{0}', space=vmem, size = 0x1000, scoped, tag = 'input window, operand 1, single buffered']
    #allocation7 [shape = 's32[1]{0}', space=sflag, size = 0x4, scoped, tag = 'scoped memory for tpu_custom_call.1']
    #allocation8 [shape = 'u8[16384]{0}', space=vmem, size = 0x4000, scoped, tag = 'input window, operand 2, single buffered']
    #allocation9 [shape = 'u8[16384]{0}', space=vmem, size = 0x4000, scoped, tag = 'input window, operand 4, single buffered']
    #allocation10 [shape = 's32[1]{0}', space=sflag, size = 0x4, scoped, tag = 'scoped memory for tpu_custom_call.1']
    #allocation11 [shape = 'u8[16384]{0}', space=vmem, size = 0x4000, scoped, tag = 'input window, operand 6, single buffered']
    #allocation12 [shape = 'u8[512]{0}', space=smem, size = 0x200, scoped, tag = 'input window, operand 9, single buffered']
    #allocation13 [shape = 'u8[512]{0}', space=smem, size = 0x200, scoped, tag = 'output window, operand 0, single buffered']
    %15 = vsyncpa [#allocation3], 0
    %16 = vsyncpa [#allocation7], 0
    %17 = vsyncpa [#allocation10], 0
    %18 = vsyncpa [#allocation5], 0
    %19 = vsyncpa [#allocation4], 0
    // Predicated region
    $region2: #{tpu_custom_call.1} parent=1 // pred_check
      _
    $region3: #{tpu_custom_call.1} parent=1 // pred_check_branch
      %21 = sbr.rel (0) target = $region5
    $region4: #{tpu_custom_call.1} parent=1 // pred_region
      %s23 = ssub.s32 128, 128
      %24 = vsyncadd [#allocation3], %s23
      %s26 = sshll.u32 [#allocation2], 4
      %s27 = int_to_ptr.vmem [resolvable:$true] %s26
      %29 = dma.hbm_to_vmem [thread:$0]  %s0, 128, %s27, [#allocation3]
    $region5: #{tpu_custom_call.1} parent=1 // pred_fallthru
      _
    // Predicated region
    $region6: #{tpu_custom_call.1} parent=1 // pred_check
      _
    $region7: #{tpu_custom_call.1} parent=1 // pred_check_branch
      %31 = sbr.rel (0) target = $region9
    $region8: #{tpu_custom_call.1} parent=1 // pred_region
      %s33 = ssub.s32 128, 128
      %34 = vsyncadd [#allocation7], %s33
      %s36 = sshll.u32 [#allocation6], 4
      %s37 = int_to_ptr.vmem [resolvable:$true] %s36
      %39 = dma.hbm_to_vmem [thread:$0]  %s1, 128, %s37, [#allocation7]
    $region9: #{tpu_custom_call.1} parent=1 // pred_fallthru
      _
    // Predicated region
    $region10: #{tpu_custom_call.1} parent=1 // pred_check
      _
    $region11: #{tpu_custom_call.1} parent=1 // pred_check_branch
      %41 = sbr.rel (0) target = $region13
    $region12: #{tpu_custom_call.1} parent=1 // pred_region
      %s43 = ssub.s32 512, 512
      %44 = vsyncadd [#allocation7], %s43
      %s45 = sshll.u32 [#allocation8], 4
      %s46 = int_to_ptr.vmem [resolvable:$true] %s45
      %51 = dma.hbm_to_vmem [thread:$0]  %s2, 512, %s46, [#allocation7], 128, 128, 8
    $region13: #{tpu_custom_call.1} parent=1 // pred_fallthru
      _
    // Predicated region
    $region14: #{tpu_custom_call.1} parent=1 // pred_check
      _
    $region15: #{tpu_custom_call.1} parent=1 // pred_check_branch
      %53 = sbr.rel (0) target = $region17
    $region16: #{tpu_custom_call.1} parent=1 // pred_region
      _
    $region17: #{tpu_custom_call.1} parent=1 // pred_fallthru
      _
    // Predicated region
    $region18: #{tpu_custom_call.1} parent=1 // pred_check
      _
    $region19: #{tpu_custom_call.1} parent=1 // pred_check_branch
      %55 = sbr.rel (0) target = $region21
    $region20: #{tpu_custom_call.1} parent=1 // pred_region
      %s57 = ssub.s32 512, 512
      %58 = vsyncadd [#allocation10], %s57
      %s59 = sshll.u32 [#allocation9], 4
      %s60 = int_to_ptr.vmem [resolvable:$true] %s59
      %65 = dma.hbm_to_vmem [thread:$0]  %s4, 512, %s60, [#allocation10], 128, 128, 8
    $region21: #{tpu_custom_call.1} parent=1 // pred_fallthru
      _
    // Predicated region
    $region22: #{tpu_custom_call.1} parent=1 // pred_check
      _
    $region23: #{tpu_custom_call.1} parent=1 // pred_check_branch
      %67 = sbr.rel (0) target = $region25
    $region24: #{tpu_custom_call.1} parent=1 // pred_region
      _
    $region25: #{tpu_custom_call.1} parent=1 // pred_fallthru
      _
    // Predicated region
    $region26: #{tpu_custom_call.1} parent=1 // pred_check
      _
    $region27: #{tpu_custom_call.1} parent=1 // pred_check_branch
      %69 = sbr.rel (0) target = $region29
    $region28: #{tpu_custom_call.1} parent=1 // pred_region
      %s71 = ssub.s32 512, 512
      %72 = vsyncadd [#allocation10], %s71
      %s73 = sshll.u32 [#allocation11], 4
      %s74 = int_to_ptr.vmem [resolvable:$true] %s73
      %79 = dma.hbm_to_vmem [thread:$0]  %s6, 512, %s74, [#allocation10], 128, 128, 8
    $region29: #{tpu_custom_call.1} parent=1 // pred_fallthru
      _
    // Predicated region
    $region30: #{tpu_custom_call.1} parent=1 // pred_check
      _
    $region31: #{tpu_custom_call.1} parent=1 // pred_check_branch
      %81 = sbr.rel (0) target = $region33
    $region32: #{tpu_custom_call.1} parent=1 // pred_region
      _
    $region33: #{tpu_custom_call.1} parent=1 // pred_fallthru
      _
    // Predicated region
    $region34: #{tpu_custom_call.1} parent=1 // pred_check
      _
    $region35: #{tpu_custom_call.1} parent=1 // pred_check_branch
      %83 = sbr.rel (0) target = $region37
    $region36: #{tpu_custom_call.1} parent=1 // pred_region
      _
    $region37: #{tpu_custom_call.1} parent=1 // pred_fallthru
      _
    // Predicated region
    $region38: #{tpu_custom_call.1} parent=1 // pred_check
      _
    $region39: #{tpu_custom_call.1} parent=1 // pred_check_branch
      %85 = sbr.rel (0) target = $region41
    $region40: #{tpu_custom_call.1} parent=1 // pred_region
      %s87 = ssub.s32 16, 16
      %88 = vsyncadd [#allocation5], %s87
      %s90 = sshll.u32 %s9, 4
      %s91 = int_to_ptr.vmem [resolvable:$true] %s90
      %93 = dma.vmem_to_smem %s91, 16, [#allocation12], [#allocation5]
    $region41: #{tpu_custom_call.1} parent=1 // pred_fallthru
      _
    // Predicated region
    $region42: #{tpu_custom_call.1} parent=1 // pred_check
      _
    $region43: #{tpu_custom_call.1} parent=1 // pred_check_branch
      %95 = sbr.rel (0) target = $region45
    $region44: #{tpu_custom_call.1} parent=1 // pred_region
      %96 = dma.done [#allocation3], 128
    $region45: #{tpu_custom_call.1} parent=1 // pred_fallthru
      _
    // Predicated region
    $region46: #{tpu_custom_call.1} parent=1 // pred_check
      _
    $region47: #{tpu_custom_call.1} parent=1 // pred_check_branch
      %98 = sbr.rel (0) target = $region49
    $region48: #{tpu_custom_call.1} parent=1 // pred_region
      %99 = dma.done [#allocation7], 128
    $region49: #{tpu_custom_call.1} parent=1 // pred_fallthru
      _
    // Predicated region
    $region50: #{tpu_custom_call.1} parent=1 // pred_check
      _
    $region51: #{tpu_custom_call.1} parent=1 // pred_check_branch
      %101 = sbr.rel (0) target = $region53
    $region52: #{tpu_custom_call.1} parent=1 // pred_region
      %102 = dma.done [#allocation7], 512
    $region53: #{tpu_custom_call.1} parent=1 // pred_fallthru
      _
    // Predicated region
    $region54: #{tpu_custom_call.1} parent=1 // pred_check
      _
    $region55: #{tpu_custom_call.1} parent=1 // pred_check_branch
      %104 = sbr.rel (0) target = $region57
    $region56: #{tpu_custom_call.1} parent=1 // pred_region
      %105 = dma.done [#allocation10], 512
    $region57: #{tpu_custom_call.1} parent=1 // pred_fallthru
      _
    // Predicated region
    $region58: #{tpu_custom_call.1} parent=1 // pred_check
      _
    $region59: #{tpu_custom_call.1} parent=1 // pred_check_branch
      %107 = sbr.rel (0) target = $region61
    $region60: #{tpu_custom_call.1} parent=1 // pred_region
      %108 = dma.done [#allocation10], 512
    $region61: #{tpu_custom_call.1} parent=1 // pred_fallthru
      _
    // Predicated region
    $region62: #{tpu_custom_call.1} parent=1 // pred_check
      _
    $region63: #{tpu_custom_call.1} parent=1 // pred_check_branch
      %110 = sbr.rel (0) target = $region65
    $region64: #{tpu_custom_call.1} parent=1 // pred_region
      %111 = dma.done [#allocation5], 16
    $region65: #{tpu_custom_call.1} parent=1 // pred_fallthru
      _
    %112 = sfence
    %v113 = vld [vmem:[#allocation2] sm:$0xff]
    %v114 = vld [vmem:[#allocation6] sm:$0xff]
    %v115 = vld [vmem:[#allocation8] sm:$0xff]
    %v116 = vld [vmem:[#allocation8 + $0x8] sm:$0xff]
    %v117 = vld [vmem:[#allocation8 + $0x10] sm:$0xff]
    %v118 = vld [vmem:[#allocation8 + $0x18] sm:$0xff]
    %v119 = vld [vmem:[%s3] sm:$0x1]
    %v121 = vlaneseq
    %v122 = vshrl.u32 %v121, 7
    %v123 = vsub.s32 0, %v122
    %v124 = vrot.slane %v119, %v123
    %vm126 = vcmask 261120
    %v128 = vsel %vm126, %v113, 0
    %130 = vmatprep.subr.mxu0 0.0
    %131 = vmatpush1.msra.mxu0 %v115
    %132 = vmatprep.subr.mxu0 0.0
    %133 = vmatpush1.msra.mxu0 %v116
    %134 = vmatprep.subr.mxu0 0.0
    %135 = vmatpush1.msra.mxu0 %v117
    %136 = vmatprep.subr.mxu0 0.0
    %137 = vmatpush1.msra.mxu0 %v118
    %138 = vmatprep.subr.mxu0 0.0
    %139 = vmatpush1.msra.mxu0 0.0
    %140 = vmatprep.subr.mxu0 0.0
    %141 = vmatpush1.msra.mxu0 0.0
    %142 = vmatprep.subr.mxu0 0.0
    %143 = vmatpush1.msra.mxu0 0.0
    %144 = vmatprep.subr.mxu0 0.0
    %145 = vmatpush1.msra.mxu0 0.0
    %146 = vmatprep.subr.mxu0 0.0
    %147 = vmatpush1.msra.mxu0 0.0
    %148 = vmatprep.subr.mxu0 0.0
    %149 = vmatpush1.msra.mxu0 0.0
    %150 = vmatprep.subr.mxu0 0.0
    %151 = vmatpush1.msra.mxu0 0.0
    %152 = vmatprep.subr.mxu0 0.0
    %153 = vmatpush1.msra.mxu0 0.0
    %154 = vmatprep.subr.mxu0 0.0
    %155 = vmatpush1.msra.mxu0 0.0
    %156 = vmatprep.subr.mxu0 0.0
    %157 = vmatpush1.msra.mxu0 0.0
    %158 = vmatprep.subr.mxu0 0.0
    %159 = vmatpush1.msra.mxu0 0.0
    %160 = vmatprep.subr.mxu0 0.0
    %161 = vmatpush1.msra.mxu0 0.0
    %162 = vmatprep.subr.mxu0 0.0
    %163 = vmatpush1.msra.mxu0 0.0
    %164 = vmatprep.subr.mxu0 0.0
    %165 = vmatpush1.msra.mxu0 0.0
    %166 = vmatprep.subr.mxu0 0.0
    %167 = vmatpush1.msra.mxu0 0.0
    %168 = vmatprep.subr.mxu0 0.0
    %169 = vmatpush1.msra.mxu0 0.0
    %170 = vmatprep.subr.mxu0 0.0
    %171 = vmatpush1.msra.mxu0 0.0
    %172 = vmatprep.subr.mxu0 0.0
    %173 = vmatpush1.msra.mxu0 0.0
    %174 = vmatprep.subr.mxu0 0.0
    %175 = vmatpush1.msra.mxu0 0.0
    %176 = vmatprep.subr.mxu0 0.0
    %177 = vmatpush1.msra.mxu0 0.0
    %178 = vmatprep.subr.mxu0 0.0
    %179 = vmatpush1.msra.mxu0 0.0
    %180 = vmatprep.subr.mxu0 0.0
    %181 = vmatpush1.msra.mxu0 0.0
    %182 = vmatprep.subr.mxu0 0.0
    %183 = vmatpush1.msra.mxu0 0.0
    %184 = vmatprep.subr.mxu0 0.0
    %185 = vmatpush1.msra.mxu0 0.0
    %186 = vmatprep.subr.mxu0 0.0
    %187 = vmatpush1.msra.mxu0 0.0
    %188 = vmatprep.subr.mxu0 0.0
    %189 = vmatpush1.msra.mxu0 0.0
    %190 = vmatprep.subr.mxu0 0.0
    %191 = vmatpush1.msra.mxu0 0.0
    %192 = vmatprep.subr.mxu0 0.0
    %193 = vmatpush1.msra.mxu0 0.0
    %194 = vmatprep.mubr.f32.mxu0 0.0
    %195 = vmatmul.mubr.f32.gmra.mrb[0].mxu0 %v128
    %v196 = vpop.f32.mrb[0].mxu0
    %v197 = vadd.f32 %v124, %v196
    %v198 = vpop.f32.mrb[0].mxu0
    %199 = vdwg.mxu0
    %v200 = vsub.f32 %v197, %v114
    %v201 = vmul.f32 %v200, %v200
    %v202 = vsel %vm126, %v201, 0.0
    %203 = vadd.xlane.f32.xlu0 %v202
    %v204 = vpop.xlane.xlu0 %203
    %v205 = vrot.slane %v204, 4
    %v206 = vadd.f32 %v204, %v205
    %v207 = vrot.slane %v206, 2
    %v208 = vadd.f32 %v206, %v207
    %v209 = vrot.slane %v208, 1
    %v210 = vadd.f32 %v208, %v209
    %s211 = vtos %v210
    %v212 = vrcp.pop 256.0
    %s213 = vtos %v212
    %s214 = smul.f32 %s211, %s213
    %v215 = vld [vmem:[#allocation9] sm:$0xff]
    %v216 = vld [vmem:[#allocation9 + $0x8] sm:$0xff]
    %v217 = vld [vmem:[#allocation9 + $0x10] sm:$0xff]
    %v218 = vld [vmem:[#allocation9 + $0x18] sm:$0xff]
    %v219 = vld [vmem:[%s5] sm:$0x1]
    %v221 = vlaneseq
    %v222 = vshrl.u32 %v221, 7
    %v223 = vsub.s32 0, %v222
    %v224 = vrot.slane %v219, %v223
    %v227 = vsel %vm126, %v114, 0
    %v230 = vsel %vm126, %v197, 0
    %232 = vmatprep.subr.mxu0 0.0
    %233 = vmatpush1.msra.mxu0 %v215
    %234 = vmatprep.subr.mxu0 0.0
    %235 = vmatpush1.msra.mxu0 %v216
    %236 = vmatprep.subr.mxu0 0.0
    %237 = vmatpush1.msra.mxu0 %v217
    %238 = vmatprep.subr.mxu0 0.0
    %239 = vmatpush1.msra.mxu0 %v218
    %240 = vmatprep.subr.mxu0 0.0
    %241 = vmatpush1.msra.mxu0 0.0
    %242 = vmatprep.subr.mxu0 0.0
    %243 = vmatpush1.msra.mxu0 0.0
    %244 = vmatprep.subr.mxu0 0.0
    %245 = vmatpush1.msra.mxu0 0.0
    %246 = vmatprep.subr.mxu0 0.0
    %247 = vmatpush1.msra.mxu0 0.0
    %248 = vmatprep.subr.mxu0 0.0
    %249 = vmatpush1.msra.mxu0 0.0
    %250 = vmatprep.subr.mxu0 0.0
    %251 = vmatpush1.msra.mxu0 0.0
    %252 = vmatprep.subr.mxu0 0.0
    %253 = vmatpush1.msra.mxu0 0.0
    %254 = vmatprep.subr.mxu0 0.0
    %255 = vmatpush1.msra.mxu0 0.0
    %256 = vmatprep.subr.mxu0 0.0
    %257 = vmatpush1.msra.mxu0 0.0
    %258 = vmatprep.subr.mxu0 0.0
    %259 = vmatpush1.msra.mxu0 0.0
    %260 = vmatprep.subr.mxu0 0.0
    %261 = vmatpush1.msra.mxu0 0.0
    %262 = vmatprep.subr.mxu0 0.0
    %263 = vmatpush1.msra.mxu0 0.0
    %264 = vmatprep.subr.mxu0 0.0
    %265 = vmatpush1.msra.mxu0 0.0
    %266 = vmatprep.subr.mxu0 0.0
    %267 = vmatpush1.msra.mxu0 0.0
    %268 = vmatprep.subr.mxu0 0.0
    %269 = vmatpush1.msra.mxu0 0.0
    %270 = vmatprep.subr.mxu0 0.0
    %271 = vmatpush1.msra.mxu0 0.0
    %272 = vmatprep.subr.mxu0 0.0
    %273 = vmatpush1.msra.mxu0 0.0
    %274 = vmatprep.subr.mxu0 0.0
    %275 = vmatpush1.msra.mxu0 0.0
    %276 = vmatprep.subr.mxu0 0.0
    %277 = vmatpush1.msra.mxu0 0.0
    %278 = vmatprep.subr.mxu0 0.0
    %279 = vmatpush1.msra.mxu0 0.0
    %280 = vmatprep.subr.mxu0 0.0
    %281 = vmatpush1.msra.mxu0 0.0
    %282 = vmatprep.subr.mxu0 0.0
    %283 = vmatpush1.msra.mxu0 0.0
    %284 = vmatprep.subr.mxu0 0.0
    %285 = vmatpush1.msra.mxu0 0.0
    %286 = vmatprep.subr.mxu0 0.0
    %287 = vmatpush1.msra.mxu0 0.0
    %288 = vmatprep.subr.mxu0 0.0
    %289 = vmatpush1.msra.mxu0 0.0
    %290 = vmatprep.subr.mxu0 0.0
    %291 = vmatpush1.msra.mxu0 0.0
    %292 = vmatprep.subr.mxu0 0.0
    %293 = vmatpush1.msra.mxu0 0.0
    %294 = vmatprep.subr.mxu0 0.0
    %295 = vmatpush1.msra.mxu0 0.0
    %296 = vmatprep.mubr.f32.mxu0 0.0
    %297 = vmatmul.mubr.f32.gmra.mrb[0].mxu0 %v227
    %v298 = vpop.f32.mrb[0].mxu0
    %v299 = vadd.f32 %v224, %v298
    %v300 = vpop.f32.mrb[0].mxu0
    %301 = vmatprep.mubr.f32.mxu0 0.0
    %302 = vmatmul.mubr.f32.gmra.mrb[0].mxu0 %v230
    %v303 = vpop.f32.mrb[0].mxu0
    %v304 = vadd.f32 %v224, %v303
    %v305 = vpop.f32.mrb[0].mxu0
    %306 = vdwg.mxu0
    %v307 = vmax.f32 %v299, 0.0
    %v308 = vmax.f32 %v304, 0.0
    %v309 = vld [vmem:[#allocation11] sm:$0xff]
    %v310 = vld [vmem:[#allocation11 + $0x8] sm:$0xff]
    %v311 = vld [vmem:[#allocation11 + $0x10] sm:$0xff]
    %v312 = vld [vmem:[#allocation11 + $0x18] sm:$0xff]
    %v313 = vld [vmem:[%s7] sm:$0x1]
    %v315 = vlaneseq
    %v316 = vshrl.u32 %v315, 7
    %v317 = vsub.s32 0, %v316
    %v318 = vrot.slane %v313, %v317
    %v321 = vsel %vm126, %v307, 0
    %v324 = vsel %vm126, %v308, 0
    %326 = vmatprep.subr.mxu0 0.0
    %327 = vmatpush1.msra.mxu0 %v309
    %328 = vmatprep.subr.mxu0 0.0
    %329 = vmatpush1.msra.mxu0 %v310
    %330 = vmatprep.subr.mxu0 0.0
    %331 = vmatpush1.msra.mxu0 %v311
    %332 = vmatprep.subr.mxu0 0.0
    %333 = vmatpush1.msra.mxu0 %v312
    %334 = vmatprep.subr.mxu0 0.0
    %335 = vmatpush1.msra.mxu0 0.0
    %336 = vmatprep.subr.mxu0 0.0
    %337 = vmatpush1.msra.mxu0 0.0
    %338 = vmatprep.subr.mxu0 0.0
    %339 = vmatpush1.msra.mxu0 0.0
    %340 = vmatprep.subr.mxu0 0.0
    %341 = vmatpush1.msra.mxu0 0.0
    %342 = vmatprep.subr.mxu0 0.0
    %343 = vmatpush1.msra.mxu0 0.0
    %344 = vmatprep.subr.mxu0 0.0
    %345 = vmatpush1.msra.mxu0 0.0
    %346 = vmatprep.subr.mxu0 0.0
    %347 = vmatpush1.msra.mxu0 0.0
    %348 = vmatprep.subr.mxu0 0.0
    %349 = vmatpush1.msra.mxu0 0.0
    %350 = vmatprep.subr.mxu0 0.0
    %351 = vmatpush1.msra.mxu0 0.0
    %352 = vmatprep.subr.mxu0 0.0
    %353 = vmatpush1.msra.mxu0 0.0
    %354 = vmatprep.subr.mxu0 0.0
    %355 = vmatpush1.msra.mxu0 0.0
    %356 = vmatprep.subr.mxu0 0.0
    %357 = vmatpush1.msra.mxu0 0.0
    %358 = vmatprep.subr.mxu0 0.0
    %359 = vmatpush1.msra.mxu0 0.0
    %360 = vmatprep.subr.mxu0 0.0
    %361 = vmatpush1.msra.mxu0 0.0
    %362 = vmatprep.subr.mxu0 0.0
    %363 = vmatpush1.msra.mxu0 0.0
    %364 = vmatprep.subr.mxu0 0.0
    %365 = vmatpush1.msra.mxu0 0.0
    %366 = vmatprep.subr.mxu0 0.0
    %367 = vmatpush1.msra.mxu0 0.0
    %368 = vmatprep.subr.mxu0 0.0
    %369 = vmatpush1.msra.mxu0 0.0
    %370 = vmatprep.subr.mxu0 0.0
    %371 = vmatpush1.msra.mxu0 0.0
    %372 = vmatprep.subr.mxu0 0.0
    %373 = vmatpush1.msra.mxu0 0.0
    %374 = vmatprep.subr.mxu0 0.0
    %375 = vmatpush1.msra.mxu0 0.0
    %376 = vmatprep.subr.mxu0 0.0
    %377 = vmatpush1.msra.mxu0 0.0
    %378 = vmatprep.subr.mxu0 0.0
    %379 = vmatpush1.msra.mxu0 0.0
    %380 = vmatprep.subr.mxu0 0.0
    %381 = vmatpush1.msra.mxu0 0.0
    %382 = vmatprep.subr.mxu0 0.0
    %383 = vmatpush1.msra.mxu0 0.0
    %384 = vmatprep.subr.mxu0 0.0
    %385 = vmatpush1.msra.mxu0 0.0
    %386 = vmatprep.subr.mxu0 0.0
    %387 = vmatpush1.msra.mxu0 0.0
    %388 = vmatprep.subr.mxu0 0.0
    %389 = vmatpush1.msra.mxu0 0.0
    %390 = vmatprep.mubr.f32.mxu0 0.0
    %391 = vmatmul.mubr.f32.gmra.mrb[0].mxu0 %v321
    %v392 = vpop.f32.mrb[0].mxu0
    %v393 = vadd.f32 %v318, %v392
    %v394 = vpop.f32.mrb[0].mxu0
    %395 = vmatprep.mubr.f32.mxu0 0.0
    %396 = vmatmul.mubr.f32.gmra.mrb[0].mxu0 %v324
    %v397 = vpop.f32.mrb[0].mxu0
    %v398 = vadd.f32 %v318, %v397
    %v399 = vpop.f32.mrb[0].mxu0
    %400 = vdwg.mxu0
    %v401 = vmax.f32 %v393, 0.0
    %v402 = vmax.f32 %v398, 0.0
    %v403 = vld [vmem:[%s8] sm:$0x1]
    %v404 = vlaneseq
    %v405 = vshrl.u32 %v404, 7
    %v406 = vsub.s32 0, %v405
    %v407 = vrot.slane %v403, %v406
    %v408 = vmul.f32 %v401, %v407
    %v409 = vmul.f32 %v402, %v407
    %v410 = vsel %vm126, %v408, 0.0
    %411 = vadd.xlane.f32.xlu0 %v410
    %v412 = vpop.xlane.xlu0 %411
    %v413 = vsel %vm126, %v409, 0.0
    %414 = vadd.xlane.f32.xlu0 %v413
    %v415 = vpop.xlane.xlu0 %414
    %s416 = sld [smem:[#allocation12]]
    %v417 = vstv %s416
    %v418 = vadd.f32 %v412, %v417
    %v419 = vadd.f32 %v415, %v417
    %v420 = vld [vmem:[%s8 + $0x1] sm:$0x1]
    %v421 = vlaneseq
    %v422 = vshrl.u32 %v421, 7
    %v423 = vsub.s32 0, %v422
    %v424 = vrot.slane %v420, %v423
    %v425 = vmul.f32 %v401, %v424
    %v426 = vmul.f32 %v402, %v424
    %v427 = vsel %vm126, %v425, 0.0
    %428 = vadd.xlane.f32.xlu0 %v427
    %v429 = vpop.xlane.xlu0 %428
    %v430 = vsel %vm126, %v426, 0.0
    %431 = vadd.xlane.f32.xlu0 %v430
    %v432 = vpop.xlane.xlu0 %431
    %s433 = sld [smem:[#allocation12 + $0x1]]
    %v434 = vstv %s433
    %v435 = vadd.f32 %v429, %v434
    %v436 = vadd.f32 %v432, %v434
    %v437 = vmax.f32 %v418, %v435
    %v438 = vmax.f32 %v419, %v436
    %v439 = vsub.f32 %v418, %v437
    %v440 = vsub.f32 %v419, %v438
    %v441 = vmul.f32 %v439, 1.442695
    %v442 = vpow.pop %v441
    %v443 = vmul.f32 %v440, 1.442695
    %v444 = vpow.pop %v443
    %v445 = vsub.f32 %v435, %v437
    %v446 = vsub.f32 %v436, %v438
    %v447 = vmul.f32 %v445, 1.442695
    %v448 = vpow.pop %v447
    %v449 = vmul.f32 %v446, 1.442695
    %v450 = vpow.pop %v449
    %v451 = vadd.f32 %v442, %v448
    %v452 = vadd.f32 %v444, %v450
    %v453 = vlog2.pop %v451
    %v454 = vmul.f32 %v453, 0.6931472
    %v455 = vlog2.pop %v452
    %v456 = vmul.f32 %v455, 0.6931472
    %v457 = vadd.f32 %v437, %v454
    %v458 = vadd.f32 %v438, %v456
    %v459 = vlaneseq
    %v460 = vshrl.u32 %v459, 7
    %v461 = vadd.s32 %v460, 8
    %vm462 = vcmp.lt.s32.totalorder %v460, 8
    %vm463 = vcmp.lt.s32.totalorder %v461, 8
    %v464 = vsel %vm462, %v435, %v418
    %v465 = vsel %vm463, %v436, %v419
    %v466 = vsub.f32 %v457, %v464
    %v467 = vsub.f32 %v458, %v465
    %vm468 = vcmask 7168
    %v469 = vsel %vm468, %v466, 0.0
    %v470 = vsel %vm468, %v467, 0.0
    %v471 = vadd.f32 %v469, %v470
    %472 = vadd.xlane.f32.xlu0 %v471
    %v473 = vpop.xlane.xlu0 %472
    %v474 = vrot.slane %v473, 4
    %v475 = vadd.f32 %v473, %v474
    %v476 = vrot.slane %v475, 2
    %v477 = vadd.f32 %v475, %v476
    %v478 = vrot.slane %v477, 1
    %v479 = vadd.f32 %v477, %v478
    %s480 = vtos %v479
    %s481 = smul.f32 %s480, 0.0625
    %v482 = vsub.f32 %v457, %v418
    %v483 = vsub.f32 %v458, %v419
    %v484 = vsel %vm462, 0.0, %v482
    %v485 = vsel %vm463, 0.0, %v483
    %v486 = vsel %vm468, %v484, 0.0
    %v487 = vsel %vm468, %v485, 0.0
    %v488 = vadd.f32 %v486, %v487
    %489 = vadd.xlane.f32.xlu0 %v488
    %v490 = vpop.xlane.xlu0 %489
    %v491 = vrot.slane %v490, 4
    %v492 = vadd.f32 %v490, %v491
    %v493 = vrot.slane %v492, 2
    %v494 = vadd.f32 %v492, %v493
    %v495 = vrot.slane %v494, 1
    %v496 = vadd.f32 %v494, %v495
    %s497 = vtos %v496
    %s498 = smul.f32 %s497, 0.125
    %s499 = smul.f32 %s498, 0.5
    %s500 = ssub.f32 %s214, %s499
    %s501 = scalar_lea.smem [#allocation13], 0
    %502 = sst [smem:[%s501]] %s500
    %s503 = scalar_lea.smem [#allocation13], 1
    %504 = sst [smem:[%s503]] %s214
    %s505 = scalar_lea.smem [#allocation13], 2
    %506 = sst [smem:[%s505]] %s498
    %s507 = scalar_lea.smem [#allocation13], 3
    %508 = sst [smem:[%s507]] %s481
    // Predicated region
    $region66: #{tpu_custom_call.1} parent=1 // pred_check
      _
    $region67: #{tpu_custom_call.1} parent=1 // pred_check_branch
      %510 = sbr.rel (0) target = $region69
    $region68: #{tpu_custom_call.1} parent=1 // pred_region
      %s512 = ssub.s32 16, 16
      %513 = vsyncadd [#allocation4], %s512
      %516 = dma.smem_to_hbm [#allocation13], 16, %s10, [#allocation4]
    $region69: #{tpu_custom_call.1} parent=1 // pred_fallthru
      _
    // Predicated region
    $region70: #{tpu_custom_call.1} parent=1 // pred_check
      _
    $region71: #{tpu_custom_call.1} parent=1 // pred_check_branch
      %518 = sbr.rel (0) target = $region73
    $region72: #{tpu_custom_call.1} parent=1 // pred_region
      %519 = dma.done [#allocation4], 16
    $region73: #{tpu_custom_call.1} parent=1 // pred_fallthru
      _
    %520 = sfence
    %521 = vsyncpa [#allocation3], 1
    %522 = vsyncpa [#allocation7], 1
    %523 = vsyncpa [#allocation10], 1
    %524 = vsyncpa [#allocation4], 1
    %525 = vsyncpa [#allocation5], 1

</llo_original>
